<compile_context>
chip_gen: v7x
topology: tpu7x:2x2x1
jax: 0.10.0
libtpu: 0.0.40
codegen_flags: <defaults>
</compile_context>

<pallas_src>
import functools

import jax
import jax.numpy as jnp
from jax.experimental import pallas as pl
from jax.experimental.pallas import tpu as pltpu


def _pair_circle_kernel(n_valid_ref,                        # SMEM scalar prefetch (1,) int32
                        row_emb_ref, col_emb_ref,           # (bm, D), (bn, D) pre-normalized
                        row_tgt_ref, col_tgt_ref,           # (bm, 1), (1, bn) int32 labels
                        out_ref,                            # (bm, 1) f32 per-row loss
                        m_p_ref, l_p_ref, m_n_ref, l_n_ref, # (bm, 1) f32 online-LSE state
                        *, margin, gamma, has_pad):
    i = pl.program_id(0)            # row-block index   ("parallel")
    j = pl.program_id(1)            # column-block index ("arbitrary", reduction)

    neg_sentinel = -99999999.0      # same finite sentinel as the torch module
    neg_init = jnp.finfo(jnp.float32).min

    # ---- per-row-block init of the running logsumexp state
    @pl.when(j == 0)
    def _init():
        m_p_ref[...] = jnp.full(m_p_ref.shape, neg_init, jnp.float32)
        m_n_ref[...] = jnp.full(m_n_ref.shape, neg_init, jnp.float32)
        l_p_ref[...] = jnp.zeros(l_p_ref.shape, jnp.float32)
        l_n_ref[...] = jnp.zeros(l_n_ref.shape, jnp.float32)

    # ---- cosine-similarity tile on the MXU: bf16 (default) operands, f32 accumulate,
    #      contracting D with D (no transpose, no in-kernel normalization).
    dist = jax.lax.dot_general(row_emb_ref[...], col_emb_ref[...],
                               dimension_numbers=(((1,), (1,)), ((), ())),
                               preferred_element_type=jnp.float32)       # (bm, bn) f32
    bm, bn = dist.shape

    same = row_tgt_ref[...] == col_tgt_ref[...]     # (bm,1) == (1,bn) -> (bm,bn) bool

    delta_p = 1.0 - margin
    delta_n = margin

    def _logits(is_pos, is_neg):
        lp = jnp.where(is_pos,
                       -gamma * jnp.maximum((1.0 + margin) - dist, 0.0) * (dist - delta_p),
                       neg_sentinel)
        ln = jnp.where(is_neg,
                       gamma * jnp.maximum(dist + delta_n, 0.0) * (dist - delta_n),
                       neg_sentinel)
        return lp, ln

    # ---- gate the diagonal-exclusion / padded-column masks behind a scalar condition:
    #      most (i, j) blocks neither intersect the diagonal nor contain padding, so the
    #      iota/compare/and passes cost nothing there.
    diag_hit = jnp.logical_and(i * bm < (j + 1) * bn, j * bn < (i + 1) * bm)
    if has_pad:
        # block j contains padded columns iff its column range extends past n_valid
        need_extra = jnp.logical_or(diag_hit, (j + 1) * bn > n_valid_ref[0])
    else:
        need_extra = diag_hit

    def _masked_branch():
        row_ids = i * bm + jax.lax.broadcasted_iota(jnp.int32, (bm, 1), 0)
        col_ids = j * bn + jax.lax.broadcasted_iota(jnp.int32, (1, bn), 1)
        col_ok = col_ids < n_valid_ref[0]                       # (1, bn)
        is_pos = same & (row_ids != col_ids) & col_ok
        is_neg = jnp.logical_not(same) & col_ok
        return _logits(is_pos, is_neg)

    def _plain_branch():
        return _logits(same, jnp.logical_not(same))

    logit_p, logit_n = jax.lax.cond(need_extra, _masked_branch, _plain_branch)

    # ---- online logsumexp over the column axis; row-sums offloaded to the (idle) MXU,
    #      row-maxes stay on the XLU.
    ones_col = jnp.ones((bn, 1), jnp.float32)

    def _online_lse(m_ref, l_ref, z):
        m_prev = m_ref[...]
        m_new = jnp.maximum(m_prev, jnp.max(z, axis=1, keepdims=True))
        p = jnp.exp(z - m_new)
        row_sum = jax.lax.dot_general(p, ones_col,
                                      dimension_numbers=(((1,), (0,)), ((), ())),
                                      preferred_element_type=jnp.float32)
        l_ref[...] = jnp.exp(m_prev - m_new) * l_ref[...] + row_sum
        m_ref[...] = m_new

    _online_lse(m_p_ref, l_p_ref, logit_p)
    _online_lse(m_n_ref, l_n_ref, logit_n)

    # ---- finalize on the last column block: per-row softplus(lse_p + lse_n)
    @pl.when(j == pl.num_programs(1) - 1)
    def _finalize():
        s = (m_p_ref[...] + jnp.log(l_p_ref[...])
             + m_n_ref[...] + jnp.log(l_n_ref[...]))
        out_ref[...] = jnp.maximum(s, 0.0) + jnp.log1p(jnp.exp(-jnp.abs(s)))


def pair_circle_loss(embedding, targets, *, margin=0.25, gamma=64.0,
                     block_m=512, block_n=512, mxu_dtype=jnp.bfloat16):
    """embedding: (N, D) float, targets: (N,) int -> scalar f32 circle loss."""
    N, D = embedding.shape

    # ---- hoisted L2 normalization (f32), then cast once to the MXU operand dtype
    x = embedding.astype(jnp.float32)
    inv = jax.lax.rsqrt(jnp.maximum(jnp.sum(x * x, axis=1, keepdims=True), 1e-24))
    emb = (x * inv).astype(mxu_dtype)
    tgt = targets.astype(jnp.int32)

    if N <= block_n:
        # Small batch: block dims == full array dims (no (8,128) issue).  Split the rows
        # into 2 blocks when cheap so both v7x TensorCores get work.
        bn = N
        bm = N // 2 if (N % 16 == 0 and N >= 32) else N
        n_pad = N
    else:
        big, small = max(block_m, block_n), min(block_m, block_n)
        assert big % small == 0, "block_m and block_n must divide each other"
        assert block_m % 8 == 0 and block_n % 128 == 0, "tile alignment"
        bm, bn = block_m, block_n
        n_pad = ((N + big - 1) // big) * big

    has_pad = n_pad != N
    if has_pad:
        emb = jnp.pad(emb, ((0, n_pad - N), (0, 0)))
        tgt = jnp.pad(tgt, (0, n_pad - N), constant_values=-1)
    tgt_rows = tgt.reshape(n_pad, 1)
    tgt_cols = tgt.reshape(1, n_pad)
    n_valid = jnp.array([N], jnp.int32)     # scalar prefetch: no recompile per N

    grid = (n_pad // bm, n_pad // bn)

    # ---- explicit VMEM budget (v7x: 64 MiB physical; v5e default scoped limit 16 MiB)
    item = jnp.dtype(mxu_dtype).itemsize
    est = (2 * bm * D * item + 2 * bn * D * item       # double-buffered embedding tiles
           + 8 * bm * bn * 4                           # live (bm, bn) f32 temporaries
           + 4 * (2 * bm + bn) * 4 + (1 << 20))        # labels / output / state / headroom
    vmem_limit = int(min(max(est, 32 * 1024 * 1024), 48 * 1024 * 1024))

    kernel = functools.partial(_pair_circle_kernel, margin=float(margin),
                               gamma=float(gamma), has_pad=has_pad)

    per_row = pl.pallas_call(
        kernel,
        out_shape=jax.ShapeDtypeStruct((n_pad, 1), jnp.float32),
        grid_spec=pltpu.PrefetchScalarGridSpec(
            num_scalar_prefetch=1,
            grid=grid,
            in_specs=[
                pl.BlockSpec((bm, D), lambda i, j, n: (i, 0)),   # row (query) tile
                pl.BlockSpec((bn, D), lambda i, j, n: (j, 0)),   # column (key) tile (streamed)
                pl.BlockSpec((bm, 1), lambda i, j, n: (i, 0)),   # row labels
                pl.BlockSpec((1, bn), lambda i, j, n: (0, j)),   # column labels
            ],
            out_specs=pl.BlockSpec((bm, 1), lambda i, j, n: (i, 0)),
            scratch_shapes=[
                pltpu.VMEM((bm, 1), jnp.float32),   # running max, positives
                pltpu.VMEM((bm, 1), jnp.float32),   # running sum, positives
                pltpu.VMEM((bm, 1), jnp.float32),   # running max, negatives
                pltpu.VMEM((bm, 1), jnp.float32),   # running sum, negatives
            ],
        ),
        compiler_params=pltpu.CompilerParams(
            dimension_semantics=("parallel", "arbitrary"),
            vmem_limit_bytes=vmem_limit),
    )(n_valid, emb, emb, tgt_rows, tgt_cols)

    # mean over the real (unpadded) rows in the wrapper
    return jnp.mean(per_row[:N, 0])


def _pair_circle_ref(embedding, targets, *, margin=0.25, gamma=64.0,
                     mxu_dtype=jnp.float32):
    """Pure-JAX reference mirroring the PyTorch module (optionally with bf16 matmul)."""
    x = embedding.astype(jnp.float32)
    e = x / jnp.maximum(jnp.linalg.norm(x, axis=1, keepdims=True), 1e-12)
    e = e.astype(mxu_dtype)
    dist = jnp.dot(e, e.T, preferred_element_type=jnp.float32,
                   precision=jax.lax.Precision.HIGHEST).astype(jnp.float32)
    N = dist.shape[0]
    t = targets.reshape(N, 1)
    is_pos = (t == t.T).astype(jnp.float32) - jnp.eye(N, dtype=jnp.float32)
    is_neg = (t != t.T).astype(jnp.float32)
    s_p = dist * is_pos
    s_n = dist * is_neg
    alpha_p = jnp.maximum(-s_p + 1.0 + margin, 0.0)
    alpha_n = jnp.maximum(s_n + margin, 0.0)
    logit_p = -gamma * alpha_p * (s_p - (1.0 - margin)) + (-99999999.0) * (1.0 - is_pos)
    logit_n = gamma * alpha_n * (s_n - margin) + (-99999999.0) * (1.0 - is_neg)
    lp = jax.scipy.special.logsumexp(logit_p, axis=1)
    ln = jax.scipy.special.logsumexp(logit_n, axis=1)
    return jnp.mean(jax.nn.softplus(lp + ln))


if __name__ == "__main__":
    key = jax.random.PRNGKey(0)
    k1, k2, k3, k4 = jax.random.split(key, 4)
    margin, gamma = 0.25, 64.0

    # Case 1: tiny batch, f32 MXU operands -> tight check of the exact module semantics.
    N1, D1 = 8, 32
    emb1 = jax.random.normal(k1, (N1, D1), dtype=jnp.float32)
    tgt1 = jax.random.randint(k2, (N1,), 0, 3, dtype=jnp.int32)
    loss1 = jax.block_until_ready(
        pair_circle_loss(emb1, tgt1, margin=margin, gamma=gamma, mxu_dtype=jnp.float32))
    ref1 = _pair_circle_ref(emb1, tgt1, margin=margin, gamma=gamma, mxu_dtype=jnp.float32)
    assert jnp.allclose(loss1, ref1, rtol=5e-4, atol=5e-4), (loss1, ref1)

    # Case 2: tiled / padded / diag-gated / online-LSE path with default bf16 MXU operands.
    N2, D2 = 200, 64
    emb2 = jax.random.normal(k3, (N2, D2), dtype=jnp.float32)
    tgt2 = jax.random.randint(k4, (N2,), 0, 5, dtype=jnp.int32)
    loss2 = jax.block_until_ready(
        pair_circle_loss(emb2, tgt2, margin=margin, gamma=gamma,
                         block_m=64, block_n=128))          # mxu_dtype defaults to bf16
    ref2_bf16 = _pair_circle_ref(emb2, tgt2, margin=margin, gamma=gamma,
                                 mxu_dtype=jnp.bfloat16)
    ref2_f32 = _pair_circle_ref(emb2, tgt2, margin=margin, gamma=gamma,
                                mxu_dtype=jnp.float32)
    # tight vs a bf16-matmul reference (same operand precision), loose vs exact f32 ref
    # (gamma=64 amplifies bf16 cosine error; see review's correctness note).
    assert jnp.allclose(loss2, ref2_bf16, rtol=2e-3, atol=2e-3), (loss2, ref2_bf16)
    assert jnp.allclose(loss2, ref2_f32, rtol=5e-2, atol=5e-2), (loss2, ref2_f32)

    print("KERNEL_OK")
</pallas_src>

<mosaic_0001>
module attributes {stable_mosaic.version = 11 : i64} {
  func.func @_pair_circle_kernel(%arg0: i32, %arg1: i32, %arg2: memref<1xi32, #tpu.memory_space<smem>>, %arg3: memref<8x32xf32, #tpu.memory_space<vmem>>, %arg4: memref<8x32xf32, #tpu.memory_space<vmem>>, %arg5: memref<8x1xi32, #tpu.memory_space<vmem>>, %arg6: memref<1x8xi32, #tpu.memory_space<vmem>>, %arg7: memref<8x1xf32, #tpu.memory_space<vmem>>, %arg8: memref<8x1xf32, #tpu.memory_space<vmem>>, %arg9: memref<8x1xf32, #tpu.memory_space<vmem>>, %arg10: memref<8x1xf32, #tpu.memory_space<vmem>>, %arg11: memref<8x1xf32, #tpu.memory_space<vmem>>) attributes {dimension_semantics = [#tpu.dimension_semantics<parallel>, #tpu.dimension_semantics<arbitrary>], iteration_bounds = array<i64: 1, 1>, scalar_prefetch = 1 : i64, scratch_operands = 4 : i64, tpu.core_type = #tpu.core_type<tc>, window_params = [{transform_indices = @transform_0, window_bounds = array<i64: 8, 32>}, {transform_indices = @transform_1, window_bounds = array<i64: 8, 32>}, {transform_indices = @transform_2, window_bounds = array<i64: 8, 1>}, {transform_indices = @transform_3, window_bounds = array<i64: 1, 8>}, {transform_indices = @transform_4, window_bounds = array<i64: 8, 1>}]} {
    %c0_i32 = arith.constant 0 : i32
    %0 = arith.cmpi eq, %arg1, %c0_i32 : i32
    %1 = arith.extui %0 : i1 to i32
    %c0_i32_0 = arith.constant 0 : i32
    %2 = arith.cmpi ne, %1, %c0_i32_0 : i32
    scf.if %2 {
      %cst_36 = arith.constant -3.40282347E+38 : f32
      %57 = vector.broadcast %cst_36 : f32 to vector<8x1xf32>
      %c0_37 = arith.constant 0 : index
      %c0_38 = arith.constant 0 : index
      %58 = vector.load %arg8[%c0_37, %c0_38] : memref<8x1xf32, #tpu.memory_space<vmem>>, vector<8x1xf32>
      tpu.vector_store %arg8[%c0_37, %c0_38], %57 {strides = array<i32>} : memref<8x1xf32, #tpu.memory_space<vmem>>, vector<8x1xf32>,
      %cst_39 = arith.constant -3.40282347E+38 : f32
      %59 = vector.broadcast %cst_39 : f32 to vector<8x1xf32>
      %c0_40 = arith.constant 0 : index
      %c0_41 = arith.constant 0 : index
      %60 = vector.load %arg10[%c0_40, %c0_41] : memref<8x1xf32, #tpu.memory_space<vmem>>, vector<8x1xf32>
      tpu.vector_store %arg10[%c0_40, %c0_41], %59 {strides = array<i32>} : memref<8x1xf32, #tpu.memory_space<vmem>>, vector<8x1xf32>,
      %cst_42 = arith.constant 0.000000e+00 : f32
      %61 = vector.broadcast %cst_42 : f32 to vector<8x1xf32>
      %c0_43 = arith.constant 0 : index
      %c0_44 = arith.constant 0 : index
      %62 = vector.load %arg9[%c0_43, %c0_44] : memref<8x1xf32, #tpu.memory_space<vmem>>, vector<8x1xf32>
      tpu.vector_store %arg9[%c0_43, %c0_44], %61 {strides = array<i32>} : memref<8x1xf32, #tpu.memory_space<vmem>>, vector<8x1xf32>,
      %cst_45 = arith.constant 0.000000e+00 : f32
      %63 = vector.broadcast %cst_45 : f32 to vector<8x1xf32>
      %c0_46 = arith.constant 0 : index
      %c0_47 = arith.constant 0 : index
      %64 = vector.load %arg11[%c0_46, %c0_47] : memref<8x1xf32, #tpu.memory_space<vmem>>, vector<8x1xf32>
      tpu.vector_store %arg11[%c0_46, %c0_47], %63 {strides = array<i32>} : memref<8x1xf32, #tpu.memory_space<vmem>>, vector<8x1xf32>,
    } else {
    }
    %c0 = arith.constant 0 : index
    %c0_1 = arith.constant 0 : index
    %3 = vector.load %arg3[%c0, %c0_1] : memref<8x32xf32, #tpu.memory_space<vmem>>, vector<8x32xf32>
    %c0_2 = arith.constant 0 : index
    %c0_3 = arith.constant 0 : index
    %4 = vector.load %arg4[%c0_2, %c0_3] : memref<8x32xf32, #tpu.memory_space<vmem>>, vector<8x32xf32>
    %cst = arith.constant dense<0.000000e+00> : vector<8x8xf32>
    %5 = tpu.matmul %3, %4, %cst {dimension_numbers = #tpu.dot_dimension_numbers<[1], [1], [0], [0], [0, 0, 1, 0], [], []>} : vector<8x32xf32>, vector<8x32xf32>, vector<8x8xf32> -> vector<8x8xf32>
    %c0_4 = arith.constant 0 : index
    %c0_5 = arith.constant 0 : index
    %6 = vector.load %arg5[%c0_4, %c0_5] : memref<8x1xi32, #tpu.memory_space<vmem>>, vector<8x1xi32>
    %c0_6 = arith.constant 0 : index
    %c0_7 = arith.constant 0 : index
    %7 = vector.load %arg6[%c0_6, %c0_7] : memref<1x8xi32, #tpu.memory_space<vmem>>, vector<1x8xi32>
    %8 = vector.broadcast %6 : vector<8x1xi32> to vector<8x8xi32>
    %9 = vector.broadcast %7 : vector<1x8xi32> to vector<8x8xi32>
    %10 = arith.cmpi eq, %8, %9 : vector<8x8xi32>
    %c8_i32 = arith.constant 8 : i32
    %11 = arith.muli %arg0, %c8_i32 : i32
    %c1_i32 = arith.constant 1 : i32
    %12 = arith.addi %arg1, %c1_i32 : i32
    %c8_i32_8 = arith.constant 8 : i32
    %13 = arith.muli %12, %c8_i32_8 : i32
    %14 = arith.cmpi slt, %11, %13 : i32
    %c8_i32_9 = arith.constant 8 : i32
    %15 = arith.muli %arg1, %c8_i32_9 : i32
    %c1_i32_10 = arith.constant 1 : i32
    %16 = arith.addi %arg0, %c1_i32_10 : i32
    %c8_i32_11 = arith.constant 8 : i32
    %17 = arith.muli %16, %c8_i32_11 : i32
    %18 = arith.cmpi slt, %15, %17 : i32
    %19 = arith.andi %14, %18 : i1
    %20 = arith.extui %19 : i1 to i32
    %c0_i32_12 = arith.constant 0 : i32
    %21 = arith.cmpi ne, %20, %c0_i32_12 : i32
    %22:2 = scf.if %21 -> (vector<8x8xf32>, vector<8x8xf32>) {
      %c8_i32_36 = arith.constant 8 : i32
      %57 = arith.muli %arg0, %c8_i32_36 : i32
      %58 = tpu.iota {dimensions = array<i32: 0>} : vector<8x1xi32>
      %59 = vector.broadcast %57 : i32 to vector<8x1xi32>
      %60 = arith.addi %59, %58 : vector<8x1xi32>
      %c8_i32_37 = arith.constant 8 : i32
      %61 = arith.muli %arg1, %c8_i32_37 : i32
      %62 = tpu.iota {dimensions = array<i32: 1>} : vector<1x8xi32>
      %63 = vector.broadcast %61 : i32 to vector<1x8xi32>
      %64 = arith.addi %63, %62 : vector<1x8xi32>
      %c0_38 = arith.constant 0 : index
      %65 = memref.load %arg2[%c0_38] : memref<1xi32, #tpu.memory_space<smem>>
      %66 = vector.broadcast %65 : i32 to vector<1x8xi32>
      %67 = arith.cmpi slt, %64, %66 : vector<1x8xi32>
      %68 = vector.broadcast %60 : vector<8x1xi32> to vector<8x8xi32>
      %69 = vector.broadcast %64 : vector<1x8xi32> to vector<8x8xi32>
      %70 = arith.cmpi ne, %68, %69 : vector<8x8xi32>
      %71 = arith.andi %10, %70 : vector<8x8xi1>
      %72 = vector.broadcast %67 : vector<1x8xi1> to vector<8x8xi1>
      %73 = arith.andi %71, %72 : vector<8x8xi1>
      %cst_39 = arith.constant dense<true> : vector<8x8xi1>
      %74 = arith.xori %10, %cst_39 : vector<8x8xi1>
      %75 = vector.broadcast %67 : vector<1x8xi1> to vector<8x8xi1>
      %76 = arith.andi %74, %75 : vector<8x8xi1>
      %cst_40 = arith.constant 1.250000e+00 : f32
      %77 = vector.broadcast %cst_40 : f32 to vector<8x8xf32>
      %78 = arith.subf %77, %5 : vector<8x8xf32>
      %cst_41 = arith.constant 0.000000e+00 : f32
      %79 = vector.broadcast %cst_41 : f32 to vector<8x8xf32>
      %80 = arith.maximumf %78, %79 : vector<8x8xf32>
      %cst_42 = arith.constant -6.400000e+01 : f32
      %81 = vector.broadcast %cst_42 : f32 to vector<8x8xf32>
      %82 = arith.mulf %81, %80 : vector<8x8xf32>
      %cst_43 = arith.constant 7.500000e-01 : f32
      %83 = vector.broadcast %cst_43 : f32 to vector<8x8xf32>
      %84 = arith.subf %5, %83 : vector<8x8xf32>
      %85 = arith.mulf %82, %84 : vector<8x8xf32>
      %cst_44 = arith.constant -1.000000e+08 : f32
      %86 = vector.broadcast %cst_44 : f32 to vector<8x8xf32>
      %87 = arith.select %73, %85, %86 : vector<8x8xi1>, vector<8x8xf32>
      %cst_45 = arith.constant 2.500000e-01 : f32
      %88 = vector.broadcast %cst_45 : f32 to vector<8x8xf32>
      %89 = arith.addf %5, %88 : vector<8x8xf32>
      %cst_46 = arith.constant 0.000000e+00 : f32
      %90 = vector.broadcast %cst_46 : f32 to vector<8x8xf32>
      %91 = arith.maximumf %89, %90 : vector<8x8xf32>
      %cst_47 = arith.constant 6.400000e+01 : f32
      %92 = vector.broadcast %cst_47 : f32 to vector<8x8xf32>
      %93 = arith.mulf %92, %91 : vector<8x8xf32>
      %cst_48 = arith.constant 2.500000e-01 : f32
      %94 = vector.broadcast %cst_48 : f32 to vector<8x8xf32>
      %95 = arith.subf %5, %94 : vector<8x8xf32>
      %96 = arith.mulf %93, %95 : vector<8x8xf32>
      %cst_49 = arith.constant -1.000000e+08 : f32
      %97 = vector.broadcast %cst_49 : f32 to vector<8x8xf32>
      %98 = arith.select %76, %96, %97 : vector<8x8xi1>, vector<8x8xf32>
      scf.yield %87, %98 : vector<8x8xf32>, vector<8x8xf32>
    } else {
      %cst_36 = arith.constant dense<true> : vector<8x8xi1>
      %57 = arith.xori %10, %cst_36 : vector<8x8xi1>
      %cst_37 = arith.constant 1.250000e+00 : f32
      %58 = vector.broadcast %cst_37 : f32 to vector<8x8xf32>
      %59 = arith.subf %58, %5 : vector<8x8xf32>
      %cst_38 = arith.constant 0.000000e+00 : f32
      %60 = vector.broadcast %cst_38 : f32 to vector<8x8xf32>
      %61 = arith.maximumf %59, %60 : vector<8x8xf32>
      %cst_39 = arith.constant -6.400000e+01 : f32
      %62 = vector.broadcast %cst_39 : f32 to vector<8x8xf32>
      %63 = arith.mulf %62, %61 : vector<8x8xf32>
      %cst_40 = arith.constant 7.500000e-01 : f32
      %64 = vector.broadcast %cst_40 : f32 to vector<8x8xf32>
      %65 = arith.subf %5, %64 : vector<8x8xf32>
      %66 = arith.mulf %63, %65 : vector<8x8xf32>
      %cst_41 = arith.constant -1.000000e+08 : f32
      %67 = vector.broadcast %cst_41 : f32 to vector<8x8xf32>
      %68 = arith.select %10, %66, %67 : vector<8x8xi1>, vector<8x8xf32>
      %cst_42 = arith.constant 2.500000e-01 : f32
      %69 = vector.broadcast %cst_42 : f32 to vector<8x8xf32>
      %70 = arith.addf %5, %69 : vector<8x8xf32>
      %cst_43 = arith.constant 0.000000e+00 : f32
      %71 = vector.broadcast %cst_43 : f32 to vector<8x8xf32>
      %72 = arith.maximumf %70, %71 : vector<8x8xf32>
      %cst_44 = arith.constant 6.400000e+01 : f32
      %73 = vector.broadcast %cst_44 : f32 to vector<8x8xf32>
      %74 = arith.mulf %73, %72 : vector<8x8xf32>
      %cst_45 = arith.constant 2.500000e-01 : f32
      %75 = vector.broadcast %cst_45 : f32 to vector<8x8xf32>
      %76 = arith.subf %5, %75 : vector<8x8xf32>
      %77 = arith.mulf %74, %76 : vector<8x8xf32>
      %cst_46 = arith.constant -1.000000e+08 : f32
      %78 = vector.broadcast %cst_46 : f32 to vector<8x8xf32>
      %79 = arith.select %57, %77, %78 : vector<8x8xi1>, vector<8x8xf32>
      scf.yield %68, %79 : vector<8x8xf32>, vector<8x8xf32>
    }
    %cst_13 = arith.constant 1.000000e+00 : f32
    %23 = vector.broadcast %cst_13 : f32 to vector<8x1xf32>
    %c0_14 = arith.constant 0 : index
    %c0_15 = arith.constant 0 : index
    %24 = vector.load %arg8[%c0_14, %c0_15] : memref<8x1xf32, #tpu.memory_space<vmem>>, vector<8x1xf32>
    %cst_16 = arith.constant dense<0xFF800000> : vector<8xf32>
    %25 = vector.multi_reduction <maximumf>, %22#0, %cst_16 [1] : vector<8x8xf32> to vector<8xf32>
    %26 = vector.shape_cast %25 : vector<8xf32> to vector<8x1xf32>
    %27 = arith.maximumf %24, %26 : vector<8x1xf32>
    %28 = vector.broadcast %27 : vector<8x1xf32> to vector<8x8xf32>
    %29 = arith.subf %22#0, %28 : vector<8x8xf32>
    %30 = math.exp %29 : vector<8x8xf32>
    %cst_17 = arith.constant dense<0.000000e+00> : vector<8x1xf32>
    %31 = tpu.matmul %30, %23, %cst_17 {dimension_numbers = #tpu.dot_dimension_numbers<[1], [0], [0], [1], [0, 0, 1, 1], [], []>} : vector<8x8xf32>, vector<8x1xf32>, vector<8x1xf32> -> vector<8x1xf32>
    %32 = arith.subf %24, %27 : vector<8x1xf32>
    %33 = math.exp %32 : vector<8x1xf32>
    %c0_18 = arith.constant 0 : index
    %c0_19 = arith.constant 0 : index
    %34 = vector.load %arg9[%c0_18, %c0_19] : memref<8x1xf32, #tpu.memory_space<vmem>>, vector<8x1xf32>
    %35 = arith.mulf %33, %34 : vector<8x1xf32>
    %36 = arith.addf %35, %31 : vector<8x1xf32>
    %c0_20 = arith.constant 0 : index
    %c0_21 = arith.constant 0 : index
    %37 = vector.load %arg9[%c0_20, %c0_21] : memref<8x1xf32, #tpu.memory_space<vmem>>, vector<8x1xf32>
    tpu.vector_store %arg9[%c0_20, %c0_21], %36 {strides = array<i32>} : memref<8x1xf32, #tpu.memory_space<vmem>>, vector<8x1xf32>,
    %c0_22 = arith.constant 0 : index
    %c0_23 = arith.constant 0 : index
    %38 = vector.load %arg8[%c0_22, %c0_23] : memref<8x1xf32, #tpu.memory_space<vmem>>, vector<8x1xf32>
    tpu.vector_store %arg8[%c0_22, %c0_23], %27 {strides = array<i32>} : memref<8x1xf32, #tpu.memory_space<vmem>>, vector<8x1xf32>,
    %c0_24 = arith.constant 0 : index
    %c0_25 = arith.constant 0 : index
    %39 = vector.load %arg10[%c0_24, %c0_25] : memref<8x1xf32, #tpu.memory_space<vmem>>, vector<8x1xf32>
    %cst_26 = arith.constant dense<0xFF800000> : vector<8xf32>
    %40 = vector.multi_reduction <maximumf>, %22#1, %cst_26 [1] : vector<8x8xf32> to vector<8xf32>
    %41 = vector.shape_cast %40 : vector<8xf32> to vector<8x1xf32>
    %42 = arith.maximumf %39, %41 : vector<8x1xf32>
    %43 = vector.broadcast %42 : vector<8x1xf32> to vector<8x8xf32>
    %44 = arith.subf %22#1, %43 : vector<8x8xf32>
    %45 = math.exp %44 : vector<8x8xf32>
    %cst_27 = arith.constant dense<0.000000e+00> : vector<8x1xf32>
    %46 = tpu.matmul %45, %23, %cst_27 {dimension_numbers = #tpu.dot_dimension_numbers<[1], [0], [0], [1], [0, 0, 1, 1], [], []>} : vector<8x8xf32>, vector<8x1xf32>, vector<8x1xf32> -> vector<8x1xf32>
    %47 = arith.subf %39, %42 : vector<8x1xf32>
    %48 = math.exp %47 : vector<8x1xf32>
    %c0_28 = arith.constant 0 : index
    %c0_29 = arith.constant 0 : index
    %49 = vector.load %arg11[%c0_28, %c0_29] : memref<8x1xf32, #tpu.memory_space<vmem>>, vector<8x1xf32>
    %50 = arith.mulf %48, %49 : vector<8x1xf32>
    %51 = arith.addf %50, %46 : vector<8x1xf32>
    %c0_30 = arith.constant 0 : index
    %c0_31 = arith.constant 0 : index
    %52 = vector.load %arg11[%c0_30, %c0_31] : memref<8x1xf32, #tpu.memory_space<vmem>>, vector<8x1xf32>
    tpu.vector_store %arg11[%c0_30, %c0_31], %51 {strides = array<i32>} : memref<8x1xf32, #tpu.memory_space<vmem>>, vector<8x1xf32>,
    %c0_32 = arith.constant 0 : index
    %c0_33 = arith.constant 0 : index
    %53 = vector.load %arg10[%c0_32, %c0_33] : memref<8x1xf32, #tpu.memory_space<vmem>>, vector<8x1xf32>
    tpu.vector_store %arg10[%c0_32, %c0_33], %42 {strides = array<i32>} : memref<8x1xf32, #tpu.memory_space<vmem>>, vector<8x1xf32>,
    %c0_i32_34 = arith.constant 0 : i32
    %54 = arith.cmpi eq, %arg1, %c0_i32_34 : i32
    %55 = arith.extui %54 : i1 to i32
    %c0_i32_35 = arith.constant 0 : i32
    %56 = arith.cmpi ne, %55, %c0_i32_35 : i32
    scf.if %56 {
      %c0_36 = arith.constant 0 : index
      %c0_37 = arith.constant 0 : index
      %57 = vector.load %arg8[%c0_36, %c0_37] : memref<8x1xf32, #tpu.memory_space<vmem>>, vector<8x1xf32>
      %c0_38 = arith.constant 0 : index
      %c0_39 = arith.constant 0 : index
      %58 = vector.load %arg9[%c0_38, %c0_39] : memref<8x1xf32, #tpu.memory_space<vmem>>, vector<8x1xf32>
      %59 = math.log %58 : vector<8x1xf32>
      %60 = arith.addf %57, %59 : vector<8x1xf32>
      %c0_40 = arith.constant 0 : index
      %c0_41 = arith.constant 0 : index
      %61 = vector.load %arg10[%c0_40, %c0_41] : memref<8x1xf32, #tpu.memory_space<vmem>>, vector<8x1xf32>
      %62 = arith.addf %60, %61 : vector<8x1xf32>
      %c0_42 = arith.constant 0 : index
      %c0_43 = arith.constant 0 : index
      %63 = vector.load %arg11[%c0_42, %c0_43] : memref<8x1xf32, #tpu.memory_space<vmem>>, vector<8x1xf32>
      %64 = math.log %63 : vector<8x1xf32>
      %65 = arith.addf %62, %64 : vector<8x1xf32>
      %cst_44 = arith.constant 0.000000e+00 : f32
      %66 = vector.broadcast %cst_44 : f32 to vector<8x1xf32>
      %67 = arith.maximumf %65, %66 : vector<8x1xf32>
      %68 = math.absf %65 : vector<8x1xf32>
      %cst_45 = arith.constant 0.000000e+00 : f32
      %69 = vector.broadcast %cst_45 : f32 to vector<8x1xf32>
      %70 = arith.subf %69, %68 : vector<8x1xf32>
      %71 = math.exp %70 : vector<8x1xf32>
      %72 = math.log1p %71 : vector<8x1xf32>
      %73 = arith.addf %67, %72 : vector<8x1xf32>
      %c0_46 = arith.constant 0 : index
      %c0_47 = arith.constant 0 : index
      %74 = vector.load %arg7[%c0_46, %c0_47] : memref<8x1xf32, #tpu.memory_space<vmem>>, vector<8x1xf32>
      tpu.vector_store %arg7[%c0_46, %c0_47], %73 {strides = array<i32>} : memref<8x1xf32, #tpu.memory_space<vmem>>, vector<8x1xf32>,
    } else {
    }
    return
  }
  func.func @transform_0(%arg0: i32, %arg1: i32, %arg2: memref<1xi32, #tpu.memory_space<smem>>) -> (i32, i32) {
    %c0_i32 = arith.constant 0 : i32
    %c0_i32_0 = arith.constant 0 : i32
    return %arg0, %c0_i32 : i32, i32
  }
  func.func @transform_1(%arg0: i32, %arg1: i32, %arg2: memref<1xi32, #tpu.memory_space<smem>>) -> (i32, i32) {
    %c0_i32 = arith.constant 0 : i32
    %c0_i32_0 = arith.constant 0 : i32
    return %arg1, %c0_i32 : i32, i32
  }
  func.func @transform_2(%arg0: i32, %arg1: i32, %arg2: memref<1xi32, #tpu.memory_space<smem>>) -> (i32, i32) {
    %c0_i32 = arith.constant 0 : i32
    %c0_i32_0 = arith.constant 0 : i32
    return %arg0, %c0_i32 : i32, i32
  }
  func.func @transform_3(%arg0: i32, %arg1: i32, %arg2: memref<1xi32, #tpu.memory_space<smem>>) -> (i32, i32) {
    %c0_i32 = arith.constant 0 : i32
    %c0_i32_0 = arith.constant 0 : i32
    return %c0_i32, %arg1 : i32, i32
  }
  func.func @transform_4(%arg0: i32, %arg1: i32, %arg2: memref<1xi32, #tpu.memory_space<smem>>) -> (i32, i32) {
    %c0_i32 = arith.constant 0 : i32
    %c0_i32_0 = arith.constant 0 : i32
    return %arg0, %c0_i32 : i32, i32
  }
}

</mosaic_0001>

<llo_original>
// kernel: tpu_custom_call.1
$region0: #{tpu_custom_call.1}
  #allocation0 [shape = 'u32[]', space=smem, size = 0x4, offset = 0x4, fixed_abs, tag = 'smem constant byte address 0x4 - core index']
  #allocation1 [shape = 'u32[144,128]{1,0:T(1,128)}', space=vmem, size = 0x12000, scoped, tag = 'internal scratch']
  #allocation2 [shape = 'f32[8,1]{1,0:T(8,128)}', space=vmem, size = 0x1000, scoped, tag = 'scratch operand']
  #allocation3 [shape = 'f32[8,1]{1,0:T(8,128)}', space=vmem, size = 0x1000, scoped, tag = 'scratch operand']
  #allocation4 [shape = 'f32[8,1]{1,0:T(8,128)}', space=vmem, size = 0x1000, scoped, tag = 'scratch operand']
  #allocation5 [shape = 'f32[8,1]{1,0:T(8,128)}', space=vmem, size = 0x1000, scoped, tag = 'scratch operand']
  #allocation6 [shape = 's32[1]{0}', space=sflag, size = 0x4, scoped, tag = 'scoped memory for tpu_custom_call.1']
  #allocation7 [shape = 's32[1]{0:T(128)S(6)}', space=smem, size = 0x200, scoped, tag = 'prefetched SMEM operand 0']
  %s0 = inlined_call_operand.<no memory space> [shape: s32[1], index: 0, kind: input, shape index: {}]
  %s1 = inlined_call_operand.vmem [shape: f32[8,32], index: 1, kind: input, shape index: {}]
  %s2 = inlined_call_operand.vmem [shape: f32[8,32], index: 2, kind: input, shape index: {}]
  %s3 = inlined_call_operand.vmem [shape: s32[8,1], index: 3, kind: input, shape index: {}]
  %s4 = inlined_call_operand.vmem [shape: s32[1,8], index: 4, kind: input, shape index: {}]
  %s5 = inlined_call_operand.vmem [shape: f32[8,1], index: 5, kind: output, shape index: {}]
  %s6 = sld [smem:[#allocation0]]
  $region42: #{tpu_custom_call.1} parent=0
    _
  %s8 = ssub.s32 1, %s6
  %s9 = scalar_select 0, %s8, %s6
  %10 = sst [smem:[#allocation7]] %s0
  // Predicated region
  $region2: #{tpu_custom_call.1} parent=0 // pred_check
    _
  $region3: #{tpu_custom_call.1} parent=0 // pred_check_branch
    %12 = sbr.rel (0) target = $region5
  $region4: #{tpu_custom_call.1} parent=0 // pred_region
    _
  $region5: #{tpu_custom_call.1} parent=0 // pred_fallthru
    _
  // Predicated region
  $region6: #{tpu_custom_call.1} parent=0 // pred_check
    _
  $region7: #{tpu_custom_call.1} parent=0 // pred_check_branch
    %14 = sbr.rel (0) target = $region9
  $region8: #{tpu_custom_call.1} parent=0 // pred_region
    _
  $region9: #{tpu_custom_call.1} parent=0 // pred_fallthru
    _
  // Predicated region
  $region10: #{tpu_custom_call.1} parent=0 // pred_check
    _
  $region11: #{tpu_custom_call.1} parent=0 // pred_check_branch
    %16 = sbr.rel (0) target = $region13
  $region12: #{tpu_custom_call.1} parent=0 // pred_region
    _
  $region13: #{tpu_custom_call.1} parent=0 // pred_fallthru
    _
  // Predicated region
  $region14: #{tpu_custom_call.1} parent=0 // pred_check
    _
  $region15: #{tpu_custom_call.1} parent=0 // pred_check_branch
    %18 = sbr.rel (0) target = $region17
  $region16: #{tpu_custom_call.1} parent=0 // pred_region
    _
  $region17: #{tpu_custom_call.1} parent=0 // pred_fallthru
    _
  %p19 = scmp.eq.s32.totalorder 0, 0
  // Predicated region
  $region18: #{tpu_custom_call.1} parent=0 // pred_check
    %p20 = pneg %p19
  $region19: #{tpu_custom_call.1} parent=0 // pred_check_branch
    %22 = sbr.rel (%p20) target = $region21
  $region20: #{tpu_custom_call.1} parent=0 // pred_region
    %vm23 = vcmask 7168
    %24 = vst.msk [vmem:[#allocation2] sm:$0xff] %vm23, -3.4028235e+38
    %25 = vst.msk [vmem:[#allocation4] sm:$0xff] %vm23, -3.4028235e+38
    %26 = vst.msk [vmem:[#allocation3] sm:$0xff] %vm23, 0.0
    %27 = vst.msk [vmem:[#allocation5] sm:$0xff] %vm23, 0.0
  $region21: #{tpu_custom_call.1} parent=0 // pred_fallthru
    _
  %v28 = vld [vmem:[%s1] sm:$0xff]
  %v29 = vld [vmem:[%s2] sm:$0xff]
  %vm30 = vcmask 261120
  %v32 = vsel %vm30, %v28, 0
  %v35 = vsel %vm30, %v29, 0
  %37 = vmatprep.subr.mxu0 0.0
  %38 = vmatpush1.xpose.msra.mxu0 %v35
  %39 = vmatprep.subr.mxu0 0.0
  %40 = vmatpush1.xpose.msra.mxu0 0.0
  %41 = vmatprep.subr.mxu0 0.0
  %42 = vmatpush1.xpose.msra.mxu0 0.0
  %43 = vmatprep.subr.mxu0 0.0
  %44 = vmatpush1.xpose.msra.mxu0 0.0
  %45 = vmatprep.subr.mxu0 0.0
  %46 = vmatpush1.xpose.msra.mxu0 0.0
  %47 = vmatprep.subr.mxu0 0.0
  %48 = vmatpush1.xpose.msra.mxu0 0.0
  %49 = vmatprep.subr.mxu0 0.0
  %50 = vmatpush1.xpose.msra.mxu0 0.0
  %51 = vmatprep.subr.mxu0 0.0
  %52 = vmatpush1.xpose.msra.mxu0 0.0
  %53 = vmatprep.subr.mxu0 0.0
  %54 = vmatpush1.xpose.msra.mxu0 0.0
  %55 = vmatprep.subr.mxu0 0.0
  %56 = vmatpush1.xpose.msra.mxu0 0.0
  %57 = vmatprep.subr.mxu0 0.0
  %58 = vmatpush1.xpose.msra.mxu0 0.0
  %59 = vmatprep.subr.mxu0 0.0
  %60 = vmatpush1.xpose.msra.mxu0 0.0
  %61 = vmatprep.subr.mxu0 0.0
  %62 = vmatpush1.xpose.msra.mxu0 0.0
  %63 = vmatprep.subr.mxu0 0.0
  %64 = vmatpush1.xpose.msra.mxu0 0.0
  %65 = vmatprep.subr.mxu0 0.0
  %66 = vmatpush1.xpose.msra.mxu0 0.0
  %67 = vmatprep.subr.mxu0 0.0
  %68 = vmatpush1.xpose.msra.mxu0 0.0
  %69 = vmatprep.subr.mxu0 0.0
  %70 = vmatpush1.xpose.msra.mxu0 0.0
  %71 = vmatprep.subr.mxu0 0.0
  %72 = vmatpush1.xpose.msra.mxu0 0.0
  %73 = vmatprep.subr.mxu0 0.0
  %74 = vmatpush1.xpose.msra.mxu0 0.0
  %75 = vmatprep.subr.mxu0 0.0
  %76 = vmatpush1.xpose.msra.mxu0 0.0
  %77 = vmatprep.subr.mxu0 0.0
  %78 = vmatpush1.xpose.msra.mxu0 0.0
  %79 = vmatprep.subr.mxu0 0.0
  %80 = vmatpush1.xpose.msra.mxu0 0.0
  %81 = vmatprep.subr.mxu0 0.0
  %82 = vmatpush1.xpose.msra.mxu0 0.0
  %83 = vmatprep.subr.mxu0 0.0
  %84 = vmatpush1.xpose.msra.mxu0 0.0
  %85 = vmatprep.subr.mxu0 0.0
  %86 = vmatpush1.xpose.msra.mxu0 0.0
  %87 = vmatprep.subr.mxu0 0.0
  %88 = vmatpush1.xpose.msra.mxu0 0.0
  %89 = vmatprep.subr.mxu0 0.0
  %90 = vmatpush1.xpose.msra.mxu0 0.0
  %91 = vmatprep.subr.mxu0 0.0
  %92 = vmatpush1.xpose.msra.mxu0 0.0
  %93 = vmatprep.subr.mxu0 0.0
  %94 = vmatpush1.xpose.msra.mxu0 0.0
  %95 = vmatprep.subr.mxu0 0.0
  %96 = vmatpush1.xpose.msra.mxu0 0.0
  %97 = vmatprep.subr.mxu0 0.0
  %98 = vmatpush1.xpose.msra.mxu0 0.0
  %99 = vmatprep.subr.mxu0 0.0
  %100 = vmatpush1.xpose.msra.mxu0 0.0
  %101 = vmatprep.mubr.f32.mxu0 0.0
  %102 = vmatmul.mubr.f32.gmra.mrb[0].mxu0 %v32
  %v103 = vpop.f32.mrb[0].mxu0
  %v104 = vadd.f32 0.0, %v103
  %v105 = vpop.f32.mrb[0].mxu0
  %106 = vdwg.mxu0
  %v107 = vld [vmem:[%s3] sm:$0xff]
  %v108 = vld [vmem:[%s4] sm:$0x1]
  %109 = vset.pattern.permute.xlu0 0
  %110 = vperm.xlu0 %109, %v107
  %v111 = vpop.permute.xlu0 %110
  %v112 = vlaneseq
  %v113 = vshrl.u32 %v112, 7
  %v114 = vsub.s32 0, %v113
  %v115 = vrot.slane %v108, %v114
  %vm116 = vcmp.eq.s32.totalorder %v111, %v115
  %s117 = smul.u32 0, 8
  %s118 = sadd.s32 0, 1
  %s119 = smul.u32 %s118, 8
  %p120 = scmp.lt.s32.totalorder %s117, %s119
  %s121 = smul.u32 0, 8
  %s122 = sadd.s32 0, 1
  %s123 = smul.u32 %s122, 8
  %p124 = scmp.lt.s32.totalorder %s121, %s123
  %p125 = pnand %p120, %p124
  %p126 = pneg %p125
  // Predicated region
  $region22: #{tpu_custom_call.1} parent=0 // pred_check
    _
  $region23: #{tpu_custom_call.1} parent=0 // pred_check_branch
    %128 = sbr.rel (%p125) target = $region25
  $region24: #{tpu_custom_call.1} parent=0 // pred_region
    %v129 = vlaneseq
    %v130 = vshrl.u32 %v129, 7
    %v131 = vstv %s117
    %v132 = vadd.s32 %v131, %v130
    %v133 = vlaneseq
    %v134 = vand.u32 %v133, 127
    %v135 = vstv %s121
    %v136 = vadd.s32 %v135, %v134
    %s137 = sld [smem:[#allocation7]]
    %v138 = vstv %s137
    %vm139 = vcmp.lt.s32.totalorder %v136, %v138
    %vm140 = vcmp.ne.s32.totalorder %v132, %v136
    %vm141 = vmand %vm116, %vm140
    %v142 = vsel %vm139, 1, 0
    %vm143 = vcmp.eq.s32.totalorder %v142, 1
    %vm144 = vmand %vm141, %vm143
    %vm145 = vmxor %vm116, 1
    %vm146 = vmand %vm145, %vm143
    %v147 = vsub.f32 1.25, %v104
    %v148 = vmax.f32 %v147, 0.0
    %v149 = vmul.f32 %v148, -64.0
    %v150 = vsub.f32 %v104, 0.75
    %v151 = vmul.f32 %v149, %v150
    %v152 = vsel %vm144, %v151, -1e+08
    %v153 = vadd.f32 %v104, 0.25
    %v154 = vmax.f32 %v153, 0.0
    %v155 = vmul.f32 %v154, 64.0
    %v156 = vsub.f32 %v104, 0.25
    %v157 = vmul.f32 %v155, %v156
    %v158 = vsel %vm146, %v157, -1e+08
  $region25: #{tpu_custom_call.1} parent=0 // pred_fallthru
    %v159 = vphi 0, %v152
    %v160 = vphi 0, %v158
  // Predicated region
  $region26: #{tpu_custom_call.1} parent=0 // pred_check
    %p161 = pneg %p125
  $region27: #{tpu_custom_call.1} parent=0 // pred_check_branch
    %163 = sbr.rel (%p161) target = $region29
  $region28: #{tpu_custom_call.1} parent=0 // pred_region
    %vm164 = vmxor %vm116, 1
    %v165 = vsub.f32 1.25, %v104
    %v166 = vmax.f32 %v165, 0.0
    %v167 = vmul.f32 %v166, -64.0
    %v168 = vsub.f32 %v104, 0.75
    %v169 = vmul.f32 %v167, %v168
    %v170 = vsel %vm116, %v169, -1e+08
    %v171 = vadd.f32 %v104, 0.25
    %v172 = vmax.f32 %v171, 0.0
    %v173 = vmul.f32 %v172, 64.0
    %v174 = vsub.f32 %v104, 0.25
    %v175 = vmul.f32 %v173, %v174
    %v176 = vsel %vm164, %v175, -1e+08
  $region29: #{tpu_custom_call.1} parent=0 // pred_fallthru
    %v177 = vphi %v159, %v170
    %v178 = vphi %v160, %v176
  %v179 = vld [vmem:[#allocation2] sm:$0xff]
  %vm180 = vcmask 64512
  %v181 = vsel %vm180, %v177, -inf
  %182 = vmax.xlane.f32.xlu0 %v181
  %v183 = vpop.xlane.xlu0 %182
  %v184 = vmax.f32 %v179, %v183
  %186 = vset.pattern.permute.xlu0 0
  %187 = vperm.xlu0 %186, %v184
  %v188 = vpop.permute.xlu0 %187
  %v190 = vsub.f32 %v177, %v188
  %v191 = vmul.f32 %v190, 1.442695
  %v192 = vpow.pop %v191
  %v194 = vsel %vm180, %v192, 0
  %196 = vmatprep.subr.mxu0 0.0
  %197 = vmatpush1.msra.mxu0 1.0
  %198 = vmatprep.subr.mxu0 0.0
  %199 = vmatpush1.msra.mxu0 0.0
  %200 = vmatprep.subr.mxu0 0.0
  %201 = vmatpush1.msra.mxu0 0.0
  %202 = vmatprep.subr.mxu0 0.0
  %203 = vmatpush1.msra.mxu0 0.0
  %204 = vmatprep.subr.mxu0 0.0
  %205 = vmatpush1.msra.mxu0 0.0
  %206 = vmatprep.subr.mxu0 0.0
  %207 = vmatpush1.msra.mxu0 0.0
  %208 = vmatprep.subr.mxu0 0.0
  %209 = vmatpush1.msra.mxu0 0.0
  %210 = vmatprep.subr.mxu0 0.0
  %211 = vmatpush1.msra.mxu0 0.0
  %212 = vmatprep.subr.mxu0 0.0
  %213 = vmatpush1.msra.mxu0 0.0
  %214 = vmatprep.subr.mxu0 0.0
  %215 = vmatpush1.msra.mxu0 0.0
  %216 = vmatprep.subr.mxu0 0.0
  %217 = vmatpush1.msra.mxu0 0.0
  %218 = vmatprep.subr.mxu0 0.0
  %219 = vmatpush1.msra.mxu0 0.0
  %220 = vmatprep.subr.mxu0 0.0
  %221 = vmatpush1.msra.mxu0 0.0
  %222 = vmatprep.subr.mxu0 0.0
  %223 = vmatpush1.msra.mxu0 0.0
  %224 = vmatprep.subr.mxu0 0.0
  %225 = vmatpush1.msra.mxu0 0.0
  %226 = vmatprep.subr.mxu0 0.0
  %227 = vmatpush1.msra.mxu0 0.0
  %228 = vmatprep.subr.mxu0 0.0
  %229 = vmatpush1.msra.mxu0 0.0
  %230 = vmatprep.subr.mxu0 0.0
  %231 = vmatpush1.msra.mxu0 0.0
  %232 = vmatprep.subr.mxu0 0.0
  %233 = vmatpush1.msra.mxu0 0.0
  %234 = vmatprep.subr.mxu0 0.0
  %235 = vmatpush1.msra.mxu0 0.0
  %236 = vmatprep.subr.mxu0 0.0
  %237 = vmatpush1.msra.mxu0 0.0
  %238 = vmatprep.subr.mxu0 0.0
  %239 = vmatpush1.msra.mxu0 0.0
  %240 = vmatprep.subr.mxu0 0.0
  %241 = vmatpush1.msra.mxu0 0.0
  %242 = vmatprep.subr.mxu0 0.0
  %243 = vmatpush1.msra.mxu0 0.0
  %244 = vmatprep.subr.mxu0 0.0
  %245 = vmatpush1.msra.mxu0 0.0
  %246 = vmatprep.subr.mxu0 0.0
  %247 = vmatpush1.msra.mxu0 0.0
  %248 = vmatprep.subr.mxu0 0.0
  %249 = vmatpush1.msra.mxu0 0.0
  %250 = vmatprep.subr.mxu0 0.0
  %251 = vmatpush1.msra.mxu0 0.0
  %252 = vmatprep.subr.mxu0 0.0
  %253 = vmatpush1.msra.mxu0 0.0
  %254 = vmatprep.subr.mxu0 0.0
  %255 = vmatpush1.msra.mxu0 0.0
  %256 = vmatprep.subr.mxu0 0.0
  %257 = vmatpush1.msra.mxu0 0.0
  %258 = vmatprep.subr.mxu0 0.0
  %259 = vmatpush1.msra.mxu0 0.0
  %260 = vmatprep.mubr.f32.mxu0 0.0
  %261 = vmatmul.mubr.f32.gmra.mrb[0].mxu0 %v194
  %v262 = vpop.f32.mrb[0].mxu0
  %v263 = vadd.f32 0.0, %v262
  %v264 = vpop.f32.mrb[0].mxu0
  %265 = vdwg.mxu0
  %v266 = vsub.f32 %v179, %v184
  %v267 = vmul.f32 %v266, 1.442695
  %v268 = vpow.pop %v267
  %v269 = vld [vmem:[#allocation3] sm:$0xff]
  %v270 = vmul.f32 %v268, %v269
  %v271 = vadd.f32 %v270, %v263
  %vm272 = vcmask 7168
  %273 = vst.msk [vmem:[#allocation3] sm:$0xff] %vm272, %v271
  %274 = vst.msk [vmem:[#allocation2] sm:$0xff] %vm272, %v184
  %v275 = vld [vmem:[#allocation4] sm:$0xff]
  %v276 = vsel %vm180, %v178, -inf
  %277 = vmax.xlane.f32.xlu0 %v276
  %v278 = vpop.xlane.xlu0 %277
  %v279 = vmax.f32 %v275, %v278
  %281 = vset.pattern.permute.xlu0 0
  %282 = vperm.xlu0 %281, %v279
  %v283 = vpop.permute.xlu0 %282
  %v285 = vsub.f32 %v178, %v283
  %v286 = vmul.f32 %v285, 1.442695
  %v287 = vpow.pop %v286
  %v289 = vsel %vm180, %v287, 0
  %291 = vmatprep.subr.mxu0 0.0
  %292 = vmatpush1.msra.mxu0 1.0
  %293 = vmatprep.subr.mxu0 0.0
  %294 = vmatpush1.msra.mxu0 0.0
  %295 = vmatprep.subr.mxu0 0.0
  %296 = vmatpush1.msra.mxu0 0.0
  %297 = vmatprep.subr.mxu0 0.0
  %298 = vmatpush1.msra.mxu0 0.0
  %299 = vmatprep.subr.mxu0 0.0
  %300 = vmatpush1.msra.mxu0 0.0
  %301 = vmatprep.subr.mxu0 0.0
  %302 = vmatpush1.msra.mxu0 0.0
  %303 = vmatprep.subr.mxu0 0.0
  %304 = vmatpush1.msra.mxu0 0.0
  %305 = vmatprep.subr.mxu0 0.0
  %306 = vmatpush1.msra.mxu0 0.0
  %307 = vmatprep.subr.mxu0 0.0
  %308 = vmatpush1.msra.mxu0 0.0
  %309 = vmatprep.subr.mxu0 0.0
  %310 = vmatpush1.msra.mxu0 0.0
  %311 = vmatprep.subr.mxu0 0.0
  %312 = vmatpush1.msra.mxu0 0.0
  %313 = vmatprep.subr.mxu0 0.0
  %314 = vmatpush1.msra.mxu0 0.0
  %315 = vmatprep.subr.mxu0 0.0
  %316 = vmatpush1.msra.mxu0 0.0
  %317 = vmatprep.subr.mxu0 0.0
  %318 = vmatpush1.msra.mxu0 0.0
  %319 = vmatprep.subr.mxu0 0.0
  %320 = vmatpush1.msra.mxu0 0.0
  %321 = vmatprep.subr.mxu0 0.0
  %322 = vmatpush1.msra.mxu0 0.0
  %323 = vmatprep.subr.mxu0 0.0
  %324 = vmatpush1.msra.mxu0 0.0
  %325 = vmatprep.subr.mxu0 0.0
  %326 = vmatpush1.msra.mxu0 0.0
  %327 = vmatprep.subr.mxu0 0.0
  %328 = vmatpush1.msra.mxu0 0.0
  %329 = vmatprep.subr.mxu0 0.0
  %330 = vmatpush1.msra.mxu0 0.0
  %331 = vmatprep.subr.mxu0 0.0
  %332 = vmatpush1.msra.mxu0 0.0
  %333 = vmatprep.subr.mxu0 0.0
  %334 = vmatpush1.msra.mxu0 0.0
  %335 = vmatprep.subr.mxu0 0.0
  %336 = vmatpush1.msra.mxu0 0.0
  %337 = vmatprep.subr.mxu0 0.0
  %338 = vmatpush1.msra.mxu0 0.0
  %339 = vmatprep.subr.mxu0 0.0
  %340 = vmatpush1.msra.mxu0 0.0
  %341 = vmatprep.subr.mxu0 0.0
  %342 = vmatpush1.msra.mxu0 0.0
  %343 = vmatprep.subr.mxu0 0.0
  %344 = vmatpush1.msra.mxu0 0.0
  %345 = vmatprep.subr.mxu0 0.0
  %346 = vmatpush1.msra.mxu0 0.0
  %347 = vmatprep.subr.mxu0 0.0
  %348 = vmatpush1.msra.mxu0 0.0
  %349 = vmatprep.subr.mxu0 0.0
  %350 = vmatpush1.msra.mxu0 0.0
  %351 = vmatprep.subr.mxu0 0.0
  %352 = vmatpush1.msra.mxu0 0.0
  %353 = vmatprep.subr.mxu0 0.0
  %354 = vmatpush1.msra.mxu0 0.0
  %355 = vmatprep.mubr.f32.mxu0 0.0
  %356 = vmatmul.mubr.f32.gmra.mrb[0].mxu0 %v289
  %v357 = vpop.f32.mrb[0].mxu0
  %v358 = vadd.f32 0.0, %v357
  %v359 = vpop.f32.mrb[0].mxu0
  %360 = vdwg.mxu0
  %v361 = vsub.f32 %v275, %v279
  %v362 = vmul.f32 %v361, 1.442695
  %v363 = vpow.pop %v362
  %v364 = vld [vmem:[#allocation5] sm:$0xff]
  %v365 = vmul.f32 %v363, %v364
  %v366 = vadd.f32 %v365, %v358
  %367 = vst.msk [vmem:[#allocation5] sm:$0xff] %vm272, %v366
  %368 = vst.msk [vmem:[#allocation4] sm:$0xff] %vm272, %v279
  // Predicated region
  $region30: #{tpu_custom_call.1} parent=0 // pred_check
    %p369 = pneg %p19
  $region31: #{tpu_custom_call.1} parent=0 // pred_check_branch
    %371 = sbr.rel (%p369) target = $region33
  $region32: #{tpu_custom_call.1} parent=0 // pred_region
    %v372 = vld [vmem:[#allocation2] sm:$0xff]
    %v373 = vld [vmem:[#allocation3] sm:$0xff]
    %v374 = vlog2.pop %v373
    %v375 = vmul.f32 %v374, 0.6931472
    %v376 = vadd.f32 %v372, %v375
    %v377 = vld [vmem:[#allocation4] sm:$0xff]
    %v378 = vadd.f32 %v376, %v377
    %v379 = vld [vmem:[#allocation5] sm:$0xff]
    %v380 = vlog2.pop %v379
    %v381 = vmul.f32 %v380, 0.6931472
    %v382 = vadd.f32 %v378, %v381
    %v383 = vmax.f32 %v382, 0.0
    %v384 = vand.u32 2147483647, %v382
    %v385 = vsub.f32 0.0, %v384
    %v386 = vmul.f32 %v385, 1.442695
    %v387 = vpow.pop %v386
    %v388 = vadd.f32 %v387, 1.0
    %v389 = vlog2.pop %v388
    %v390 = vmul.f32 %v389, 0.6931472
    %v391 = vmul.f32 -0.5, %v387
    %v392 = vadd.f32 %v391, 1.0
    %v393 = vmul.f32 %v392, %v387
    %v394 = vand.u32 2147483647, %v387
    %vm395 = vcmp.lt.f32.partialorder %v394, 0.0004427343
    %v396 = vsel %vm395, %v393, %v390
    %v397 = vadd.f32 %v383, %v396
    %398 = vst.msk [vmem:[%s5] sm:$0xff] %vm272, %v397
  $region33: #{tpu_custom_call.1} parent=0 // pred_fallthru
    _
  // Predicated region
  $region34: #{tpu_custom_call.1} parent=0 // pred_check
    _
  $region35: #{tpu_custom_call.1} parent=0 // pred_check_branch
    %400 = sbr.rel (0) target = $region37
  $region36: #{tpu_custom_call.1} parent=0 // pred_region
    _
  $region37: #{tpu_custom_call.1} parent=0 // pred_fallthru
    _
  // Predicated region
  $region38: #{tpu_custom_call.1} parent=0 // pred_check
    _
  $region39: #{tpu_custom_call.1} parent=0 // pred_check_branch
    %402 = sbr.rel (0) target = $region41
  $region40: #{tpu_custom_call.1} parent=0 // pred_region
    _
  $region41: #{tpu_custom_call.1} parent=0 // pred_fallthru
    _

</llo_original>
